<compile_context>
chip_gen: v6e
topology: v6e:2x2x1
jax: 0.10.0
libtpu: 0.0.40
codegen_flags: <defaults>
</compile_context>

<pallas_src>
import jax
import jax.numpy as jnp
from jax.experimental import pallas as pl
from jax.experimental.pallas import tpu as pltpu

EPS = 1e-07


def _round_up(x, m):
    return (x + m - 1) // m * m


def _dice_rows_kernel(o_ref, m_ref, dice_ref, num_sc, den1_sc, den2_sc):
    """Process one (row_tile, col_tile) block.

    Accumulates per-row partial sums over the column (spatial reduction) grid
    axis in VMEM scratch; on the last column step converts them to per-row dice.
    """
    c = pl.program_id(1)

    @pl.when(c == 0)
    def _():
        num_sc[...] = jnp.zeros_like(num_sc)
        den1_sc[...] = jnp.zeros_like(den1_sc)
        den2_sc[...] = jnp.zeros_like(den2_sc)

    # Upcast per-tile (inputs may be bf16 to halve HBM traffic); accumulate f32.
    o = o_ref[...].astype(jnp.float32)
    m = m_ref[...].astype(jnp.float32)

    num_sc[...] += jnp.sum(o * m, axis=-1, keepdims=True)
    den1_sc[...] += jnp.sum(o * o, axis=-1, keepdims=True)
    den2_sc[...] += jnp.sum(m * m, axis=-1, keepdims=True)

    @pl.when(c == pl.num_programs(1) - 1)
    def _():
        dice_ref[...] = 2.0 * (num_sc[...] + EPS) / (
            den1_sc[...] + den2_sc[...] + EPS
        )


def dice_loss_multiclass(output, mask, *, row_tile=None, col_tile=None):
    """output, mask: float arrays of shape (N, C, H, W). Returns scalar loss."""
    n, ch, h, w = output.shape
    rows, cols = n * ch, h * w
    o2 = output.reshape(rows, cols)
    m2 = mask.reshape(rows, cols)

    # Tile selection: lane-dense columns (multiple of 128, up to 8192) and
    # sublane-aligned rows (multiple of 8, up to 64).  Max block = 64*8192*4B
    # = 2 MiB per input, so 2 inputs x 2 pipeline buffers = 8 MiB — fits the
    # 16 MiB v5e scoped-VMEM default and is comfortably inside v6e/v7x limits.
    if col_tile is None:
        col_tile = min(_round_up(cols, 128), 8192)
    if row_tile is None:
        row_tile = min(_round_up(rows, 8), 64)

    pr = _round_up(rows, row_tile)
    pc = _round_up(cols, col_tile)
    if (pr, pc) != (rows, cols):
        # Zero padding is exact: padded columns add 0 to every per-row sum and
        # padded rows are sliced off before the final reduction.
        o2 = jnp.pad(o2, ((0, pr - rows), (0, pc - cols)))
        m2 = jnp.pad(m2, ((0, pr - rows), (0, pc - cols)))

    grid = (pr // row_tile, pc // col_tile)  # rows outer (parallel), cols inner (reduction)

    itemsize = jnp.dtype(output.dtype).itemsize
    cost = pl.CostEstimate(
        flops=6 * rows * cols,          # 3 muls + 3 adds per element (approx)
        transcendentals=0,
        bytes_accessed=2 * rows * cols * itemsize + rows * 4,
    )

    dice = pl.pallas_call(
        _dice_rows_kernel,
        out_shape=jax.ShapeDtypeStruct((pr, 1), jnp.float32),
        grid_spec=pltpu.PrefetchScalarGridSpec(
            num_scalar_prefetch=0,
            grid=grid,
            in_specs=[
                pl.BlockSpec((row_tile, col_tile), lambda r, c: (r, c)),
                pl.BlockSpec((row_tile, col_tile), lambda r, c: (r, c)),
            ],
            out_specs=pl.BlockSpec((row_tile, 1), lambda r, c: (r, 0)),
            scratch_shapes=[pltpu.VMEM((row_tile, 1), jnp.float32)] * 3,
        ),
        compiler_params=pltpu.CompilerParams(
            dimension_semantics=("parallel", "arbitrary"),
        ),
        cost_estimate=cost,
    )(o2, m2)

    dice = dice[:rows, 0]                       # per-(n, c) dice, padding dropped
    # dice_eso[n] = sum_c dice[n, c];  loss = 1 - sum_n dice_eso[n] / N
    return 1.0 - jnp.sum(dice) / float(n)


def _reference_loss(output, mask):
    # Pure-JAX reference of the intended forward semantics.
    num = jnp.sum(output * mask, axis=(2, 3))
    den1 = jnp.sum(output * output, axis=(2, 3))
    den2 = jnp.sum(mask * mask, axis=(2, 3))
    dice = 2.0 * (num + EPS) / (den1 + den2 + EPS)
    dice_eso = jnp.sum(dice, axis=1)
    return 1.0 - jnp.sum(dice_eso) / output.shape[0]


if __name__ == "__main__":
    key = jax.random.PRNGKey(0)
    k_logits, k_labels = jax.random.split(key)

    N, C, H, W = 2, 4, 16, 16

    # Soft predictions: per-pixel softmax over the class dim.
    logits = jax.random.normal(k_logits, (N, C, H, W), dtype=jnp.float32)
    output = jax.nn.softmax(logits, axis=1)

    # Ground-truth mask: one-hot labels, laid out as (N, C, H, W).
    labels = jax.random.randint(k_labels, (N, H, W), 0, C)
    mask = jnp.transpose(
        jax.nn.one_hot(labels, C, dtype=jnp.float32), (0, 3, 1, 2)
    )

    ref = _reference_loss(output, mask)

    # 1) Default tiling (single column step at this toy size).
    loss = jax.block_until_ready(dice_loss_multiclass(output, mask))
    assert jnp.allclose(loss, ref, rtol=1e-5, atol=1e-5), (loss, ref)

    # 2) Forced small tiles to exercise the multi-step column accumulation path.
    loss_tiled = jax.block_until_ready(
        dice_loss_multiclass(output, mask, row_tile=8, col_tile=128)
    )
    assert jnp.allclose(loss_tiled, ref, rtol=1e-5, atol=1e-5), (loss_tiled, ref)

    print("KERNEL_OK")
</pallas_src>

<mosaic_0001>
module attributes {stable_mosaic.version = 11 : i64} {
  func.func @_dice_rows_kernel(%arg0: i32, %arg1: i32, %arg2: memref<8x256xf32, #tpu.memory_space<vmem>>, %arg3: memref<8x256xf32, #tpu.memory_space<vmem>>, %arg4: memref<8x1xf32, #tpu.memory_space<vmem>>, %arg5: memref<8x1xf32, #tpu.memory_space<vmem>>, %arg6: memref<8x1xf32, #tpu.memory_space<vmem>>, %arg7: memref<8x1xf32, #tpu.memory_space<vmem>>) attributes {dimension_semantics = [#tpu.dimension_semantics<parallel>, #tpu.dimension_semantics<arbitrary>], iteration_bounds = array<i64: 1, 1>, scalar_prefetch = 0 : i64, scratch_operands = 3 : i64, tpu.core_type = #tpu.core_type<tc>, window_params = [{transform_indices = @transform_0, window_bounds = array<i64: 8, 256>}, {transform_indices = @transform_1, window_bounds = array<i64: 8, 256>}, {transform_indices = @transform_2, window_bounds = array<i64: 8, 1>}]} {
    %c0_i32 = arith.constant 0 : i32
    %0 = arith.cmpi eq, %arg1, %c0_i32 : i32
    %1 = arith.extui %0 : i1 to i32
    %c0_i32_0 = arith.constant 0 : i32
    %2 = arith.cmpi ne, %1, %c0_i32_0 : i32
    scf.if %2 {
      %cst_20 = arith.constant 0.000000e+00 : f32
      %26 = vector.broadcast %cst_20 : f32 to vector<8x1xf32>
      %c0_21 = arith.constant 0 : index
      %c0_22 = arith.constant 0 : index
      %27 = vector.load %arg5[%c0_21, %c0_22] : memref<8x1xf32, #tpu.memory_space<vmem>>, vector<8x1xf32>
      tpu.vector_store %arg5[%c0_21, %c0_22], %26 {strides = array<i32>} : memref<8x1xf32, #tpu.memory_space<vmem>>, vector<8x1xf32>,
      %cst_23 = arith.constant 0.000000e+00 : f32
      %28 = vector.broadcast %cst_23 : f32 to vector<8x1xf32>
      %c0_24 = arith.constant 0 : index
      %c0_25 = arith.constant 0 : index
      %29 = vector.load %arg6[%c0_24, %c0_25] : memref<8x1xf32, #tpu.memory_space<vmem>>, vector<8x1xf32>
      tpu.vector_store %arg6[%c0_24, %c0_25], %28 {strides = array<i32>} : memref<8x1xf32, #tpu.memory_space<vmem>>, vector<8x1xf32>,
      %cst_26 = arith.constant 0.000000e+00 : f32
      %30 = vector.broadcast %cst_26 : f32 to vector<8x1xf32>
      %c0_27 = arith.constant 0 : index
      %c0_28 = arith.constant 0 : index
      %31 = vector.load %arg7[%c0_27, %c0_28] : memref<8x1xf32, #tpu.memory_space<vmem>>, vector<8x1xf32>
      tpu.vector_store %arg7[%c0_27, %c0_28], %30 {strides = array<i32>} : memref<8x1xf32, #tpu.memory_space<vmem>>, vector<8x1xf32>,
    } else {
    }
    %c0 = arith.constant 0 : index
    %c0_1 = arith.constant 0 : index
    %3 = vector.load %arg2[%c0, %c0_1] : memref<8x256xf32, #tpu.memory_space<vmem>>, vector<8x256xf32>
    %c0_2 = arith.constant 0 : index
    %c0_3 = arith.constant 0 : index
    %4 = vector.load %arg3[%c0_2, %c0_3] : memref<8x256xf32, #tpu.memory_space<vmem>>, vector<8x256xf32>
    %c0_4 = arith.constant 0 : index
    %c0_5 = arith.constant 0 : index
    %5 = vector.load %arg5[%c0_4, %c0_5] : memref<8x1xf32, #tpu.memory_space<vmem>>, vector<8x1xf32>
    %6 = arith.mulf %3, %4 : vector<8x256xf32>
    %cst = arith.constant dense<0.000000e+00> : vector<8xf32>
    %7 = vector.multi_reduction <add>, %6, %cst [1] : vector<8x256xf32> to vector<8xf32>
    %8 = vector.shape_cast %7 : vector<8xf32> to vector<8x1xf32>
    %9 = arith.addf %5, %8 : vector<8x1xf32>
    %c0_6 = arith.constant 0 : index
    %c0_7 = arith.constant 0 : index
    %10 = vector.load %arg5[%c0_6, %c0_7] : memref<8x1xf32, #tpu.memory_space<vmem>>, vector<8x1xf32>
    tpu.vector_store %arg5[%c0_6, %c0_7], %9 {strides = array<i32>} : memref<8x1xf32, #tpu.memory_space<vmem>>, vector<8x1xf32>,
    %c0_8 = arith.constant 0 : index
    %c0_9 = arith.constant 0 : index
    %11 = vector.load %arg6[%c0_8, %c0_9] : memref<8x1xf32, #tpu.memory_space<vmem>>, vector<8x1xf32>
    %12 = arith.mulf %3, %3 : vector<8x256xf32>
    %cst_10 = arith.constant dense<0.000000e+00> : vector<8xf32>
    %13 = vector.multi_reduction <add>, %12, %cst_10 [1] : vector<8x256xf32> to vector<8xf32>
    %14 = vector.shape_cast %13 : vector<8xf32> to vector<8x1xf32>
    %15 = arith.addf %11, %14 : vector<8x1xf32>
    %c0_11 = arith.constant 0 : index
    %c0_12 = arith.constant 0 : index
    %16 = vector.load %arg6[%c0_11, %c0_12] : memref<8x1xf32, #tpu.memory_space<vmem>>, vector<8x1xf32>
    tpu.vector_store %arg6[%c0_11, %c0_12], %15 {strides = array<i32>} : memref<8x1xf32, #tpu.memory_space<vmem>>, vector<8x1xf32>,
    %c0_13 = arith.constant 0 : index
    %c0_14 = arith.constant 0 : index
    %17 = vector.load %arg7[%c0_13, %c0_14] : memref<8x1xf32, #tpu.memory_space<vmem>>, vector<8x1xf32>
    %18 = arith.mulf %4, %4 : vector<8x256xf32>
    %cst_15 = arith.constant dense<0.000000e+00> : vector<8xf32>
    %19 = vector.multi_reduction <add>, %18, %cst_15 [1] : vector<8x256xf32> to vector<8xf32>
    %20 = vector.shape_cast %19 : vector<8xf32> to vector<8x1xf32>
    %21 = arith.addf %17, %20 : vector<8x1xf32>
    %c0_16 = arith.constant 0 : index
    %c0_17 = arith.constant 0 : index
    %22 = vector.load %arg7[%c0_16, %c0_17] : memref<8x1xf32, #tpu.memory_space<vmem>>, vector<8x1xf32>
    tpu.vector_store %arg7[%c0_16, %c0_17], %21 {strides = array<i32>} : memref<8x1xf32, #tpu.memory_space<vmem>>, vector<8x1xf32>,
    %c0_i32_18 = arith.constant 0 : i32
    %23 = arith.cmpi eq, %arg1, %c0_i32_18 : i32
    %24 = arith.extui %23 : i1 to i32
    %c0_i32_19 = arith.constant 0 : i32
    %25 = arith.cmpi ne, %24, %c0_i32_19 : i32
    scf.if %25 {
      %c0_20 = arith.constant 0 : index
      %c0_21 = arith.constant 0 : index
      %26 = vector.load %arg5[%c0_20, %c0_21] : memref<8x1xf32, #tpu.memory_space<vmem>>, vector<8x1xf32>
      %cst_22 = arith.constant 1.000000e-07 : f32
      %27 = vector.broadcast %cst_22 : f32 to vector<8x1xf32>
      %28 = arith.addf %26, %27 : vector<8x1xf32>
      %cst_23 = arith.constant 2.000000e+00 : f32
      %29 = vector.broadcast %cst_23 : f32 to vector<8x1xf32>
      %30 = arith.mulf %29, %28 : vector<8x1xf32>
      %c0_24 = arith.constant 0 : index
      %c0_25 = arith.constant 0 : index
      %31 = vector.load %arg6[%c0_24, %c0_25] : memref<8x1xf32, #tpu.memory_space<vmem>>, vector<8x1xf32>
      %c0_26 = arith.constant 0 : index
      %c0_27 = arith.constant 0 : index
      %32 = vector.load %arg7[%c0_26, %c0_27] : memref<8x1xf32, #tpu.memory_space<vmem>>, vector<8x1xf32>
      %33 = arith.addf %31, %32 : vector<8x1xf32>
      %cst_28 = arith.constant 1.000000e-07 : f32
      %34 = vector.broadcast %cst_28 : f32 to vector<8x1xf32>
      %35 = arith.addf %33, %34 : vector<8x1xf32>
      %36 = arith.divf %30, %35 : vector<8x1xf32>
      %c0_29 = arith.constant 0 : index
      %c0_30 = arith.constant 0 : index
      %37 = vector.load %arg4[%c0_29, %c0_30] : memref<8x1xf32, #tpu.memory_space<vmem>>, vector<8x1xf32>
      tpu.vector_store %arg4[%c0_29, %c0_30], %36 {strides = array<i32>} : memref<8x1xf32, #tpu.memory_space<vmem>>, vector<8x1xf32>,
    } else {
    }
    return
  }
  func.func @transform_0(%arg0: i32, %arg1: i32) -> (i32, i32) {
    %c0_i32 = arith.constant 0 : i32
    return %arg0, %arg1 : i32, i32
  }
  func.func @transform_1(%arg0: i32, %arg1: i32) -> (i32, i32) {
    %c0_i32 = arith.constant 0 : i32
    return %arg0, %arg1 : i32, i32
  }
  func.func @transform_2(%arg0: i32, %arg1: i32) -> (i32, i32) {
    %c0_i32 = arith.constant 0 : i32
    %c0_i32_0 = arith.constant 0 : i32
    return %arg0, %c0_i32 : i32, i32
  }
}

</mosaic_0001>

<llo_original>
// kernel: tpu_custom_call.1
$region0: #{tpu_custom_call.1}
  #allocation0 [shape = 'u32[]', space=smem, size = 0x4, offset = 0x4, fixed_abs, tag = 'smem constant byte address 0x4 - core index']
  #allocation1 [shape = 'u32[144,128]{1,0:T(1,128)}', space=vmem, size = 0x12000, scoped, tag = 'internal scratch']
  #allocation2 [shape = 'f32[8,1]{1,0:T(8,128)}', space=vmem, size = 0x1000, scoped, tag = 'scratch operand']
  #allocation3 [shape = 'f32[8,1]{1,0:T(8,128)}', space=vmem, size = 0x1000, scoped, tag = 'scratch operand']
  #allocation4 [shape = 'f32[8,1]{1,0:T(8,128)}', space=vmem, size = 0x1000, scoped, tag = 'scratch operand']
  %s0 = inlined_call_operand.hbm [shape: f32[8,256], index: 0, kind: input, shape index: {}]
  %s1 = inlined_call_operand.hbm [shape: f32[8,256], index: 1, kind: input, shape index: {}]
  %s2 = inlined_call_operand.vmem [shape: f32[8,1], index: 2, kind: output, shape index: {}]
  %s3 = sld [smem:[#allocation0]]
  $region34: #{tpu_custom_call.1} parent=0
    _
  %s5 = ssub.s32 1, %s3
  %s6 = scalar_select 0, %s5, %s3
  $region1: #{tpu_custom_call.1} parent=0
    #allocation5 [shape = 'u8[8192]{0}', space=vmem, size = 0x2000, scoped, tag = 'input window, operand 0, single buffered']
    #allocation6 [shape = 's32[1]{0}', space=sflag, size = 0x4, scoped, tag = 'scoped memory for tpu_custom_call.1']
    #allocation7 [shape = 'u8[8192]{0}', space=vmem, size = 0x2000, scoped, tag = 'input window, operand 1, single buffered']
    #allocation8 [shape = 's32[1]{0}', space=sflag, size = 0x4, scoped, tag = 'scoped memory for tpu_custom_call.1']
    %7 = vsyncpa [#allocation6], 0
    %8 = vsyncpa [#allocation8], 0
    // Predicated region
    $region2: #{tpu_custom_call.1} parent=1 // pred_check
      _
    $region3: #{tpu_custom_call.1} parent=1 // pred_check_branch
      %10 = sbr.rel (0) target = $region5
    $region4: #{tpu_custom_call.1} parent=1 // pred_region
      %s12 = ssub.s32 256, 256
      %13 = vsyncadd [#allocation6], %s12
      %s15 = sshll.u32 [#allocation5], 4
      %s16 = int_to_ptr.vmem [resolvable:$true] %s15
      %18 = dma.hbm_to_vmem [thread:$0]  %s0, 256, %s16, [#allocation6]
    $region5: #{tpu_custom_call.1} parent=1 // pred_fallthru
      _
    // Predicated region
    $region6: #{tpu_custom_call.1} parent=1 // pred_check
      _
    $region7: #{tpu_custom_call.1} parent=1 // pred_check_branch
      %20 = sbr.rel (0) target = $region9
    $region8: #{tpu_custom_call.1} parent=1 // pred_region
      %s22 = ssub.s32 256, 256
      %23 = vsyncadd [#allocation8], %s22
      %s25 = sshll.u32 [#allocation7], 4
      %s26 = int_to_ptr.vmem [resolvable:$true] %s25
      %28 = dma.hbm_to_vmem [thread:$0]  %s1, 256, %s26, [#allocation8]
    $region9: #{tpu_custom_call.1} parent=1 // pred_fallthru
      _
    // Predicated region
    $region10: #{tpu_custom_call.1} parent=1 // pred_check
      _
    $region11: #{tpu_custom_call.1} parent=1 // pred_check_branch
      %30 = sbr.rel (0) target = $region13
    $region12: #{tpu_custom_call.1} parent=1 // pred_region
      %31 = dma.done [#allocation6], 256
    $region13: #{tpu_custom_call.1} parent=1 // pred_fallthru
      _
    // Predicated region
    $region14: #{tpu_custom_call.1} parent=1 // pred_check
      _
    $region15: #{tpu_custom_call.1} parent=1 // pred_check_branch
      %33 = sbr.rel (0) target = $region17
    $region16: #{tpu_custom_call.1} parent=1 // pred_region
      %34 = dma.done [#allocation8], 256
    $region17: #{tpu_custom_call.1} parent=1 // pred_fallthru
      _
    %p35 = scmp.eq.s32.totalorder 0, 0
    // Predicated region
    $region18: #{tpu_custom_call.1} parent=1 // pred_check
      %p36 = pneg %p35
    $region19: #{tpu_custom_call.1} parent=1 // pred_check_branch
      %38 = sbr.rel (%p36) target = $region21
    $region20: #{tpu_custom_call.1} parent=1 // pred_region
      %vm39 = vcmask 7168
      %40 = vst.msk [vmem:[#allocation2] sm:$0xff] %vm39, 0.0
      %41 = vst.msk [vmem:[#allocation3] sm:$0xff] %vm39, 0.0
      %42 = vst.msk [vmem:[#allocation4] sm:$0xff] %vm39, 0.0
    $region21: #{tpu_custom_call.1} parent=1 // pred_fallthru
      _
    %v43 = vld [vmem:[#allocation5] sm:$0xff]
    %v44 = vld [vmem:[#allocation5 + $0x8] sm:$0xff]
    %v45 = vld [vmem:[#allocation7] sm:$0xff]
    %v46 = vld [vmem:[#allocation7 + $0x8] sm:$0xff]
    %v47 = vld [vmem:[#allocation2] sm:$0xff]
    %v48 = vmul.f32 %v43, %v45
    %v49 = vmul.f32 %v44, %v46
    %v50 = vadd.f32 %v48, %v49
    %51 = vadd.xlane.f32.xlu0 %v50
    %v52 = vpop.xlane.xlu0 %51
    %v53 = vadd.f32 %v47, %v52
    %vm54 = vcmask 7168
    %55 = vst.msk [vmem:[#allocation2] sm:$0xff] %vm54, %v53
    %v56 = vld [vmem:[#allocation3] sm:$0xff]
    %v57 = vmul.f32 %v43, %v43
    %v58 = vmul.f32 %v44, %v44
    %v59 = vadd.f32 %v57, %v58
    %60 = vadd.xlane.f32.xlu0 %v59
    %v61 = vpop.xlane.xlu0 %60
    %v62 = vadd.f32 %v56, %v61
    %63 = vst.msk [vmem:[#allocation3] sm:$0xff] %vm54, %v62
    %v64 = vld [vmem:[#allocation4] sm:$0xff]
    %v65 = vmul.f32 %v45, %v45
    %v66 = vmul.f32 %v46, %v46
    %v67 = vadd.f32 %v65, %v66
    %68 = vadd.xlane.f32.xlu0 %v67
    %v69 = vpop.xlane.xlu0 %68
    %v70 = vadd.f32 %v64, %v69
    %71 = vst.msk [vmem:[#allocation4] sm:$0xff] %vm54, %v70
    // Predicated region
    $region22: #{tpu_custom_call.1} parent=1 // pred_check
      %p72 = pneg %p35
    $region23: #{tpu_custom_call.1} parent=1 // pred_check_branch
      %74 = sbr.rel (%p72) target = $region25
    $region24: #{tpu_custom_call.1} parent=1 // pred_region
      %v75 = vld [vmem:[#allocation2] sm:$0xff]
      %v76 = vadd.f32 %v75, 1e-07
      %v77 = vmul.f32 %v76, 2.0
      %v78 = vld [vmem:[#allocation3] sm:$0xff]
      %v79 = vld [vmem:[#allocation4] sm:$0xff]
      %v80 = vadd.f32 %v78, %v79
      %v81 = vadd.f32 %v80, 1e-07
      %v82 = vrcp.pop %v81
      %v83 = vmul.f32 %v77, %v82
      %84 = vst.msk [vmem:[%s2] sm:$0xff] %vm54, %v83
    $region25: #{tpu_custom_call.1} parent=1 // pred_fallthru
      _
    // Predicated region
    $region26: #{tpu_custom_call.1} parent=1 // pred_check
      _
    $region27: #{tpu_custom_call.1} parent=1 // pred_check_branch
      %86 = sbr.rel (0) target = $region29
    $region28: #{tpu_custom_call.1} parent=1 // pred_region
      _
    $region29: #{tpu_custom_call.1} parent=1 // pred_fallthru
      _
    // Predicated region
    $region30: #{tpu_custom_call.1} parent=1 // pred_check
      _
    $region31: #{tpu_custom_call.1} parent=1 // pred_check_branch
      %88 = sbr.rel (0) target = $region33
    $region32: #{tpu_custom_call.1} parent=1 // pred_region
      _
    $region33: #{tpu_custom_call.1} parent=1 // pred_fallthru
      _
    %89 = vsyncpa [#allocation6], 1
    %90 = vsyncpa [#allocation8], 1

</llo_original>
